<compile_context>
chip_gen: v7x
topology: tpu7x:2x2x1
jax: 0.10.0
libtpu: 0.0.40
codegen_flags: <defaults>
</compile_context>

<pallas_src>
import functools

import jax
import jax.numpy as jnp
from jax.experimental import pallas as pl
from jax.experimental.pallas import tpu as pltpu

_SQRT_HALF = 0.7071067811865476  # 1/sqrt(2)


def _round_up(v, m):
    return (v + m - 1) // m * m


def _gelu_exact(x):
    # exact GELU: 0.5 * x * (1 + erf(x / sqrt(2)))  (matches nn.GELU() default)
    return 0.5 * x * (1.0 + jax.lax.erf(x * _SQRT_HALF))


def _gelu_tanh(x):
    return jax.nn.gelu(x, approximate=True)


# ---------------------------------------------------------------------------
# Kernel
# ---------------------------------------------------------------------------
def residual_block_kernel(x_ref, wa_ref, ba_ref, w2_ref, b2_ref, o_ref, *,
                          approximate_gelu):
    """One batch tile.

    x_ref : (TM, F_in_p)             input tile (streamed over the grid)
    wa_ref: (F_in_p, 2*F_out_p)      [Linear1 (BN-folded) | skip Linear] weights (resident)
    ba_ref: (1, 2*F_out_p)           corresponding biases (f32)
    w2_ref: (F_out_p, F_out_p)       Linear2 (BN-folded) weights (resident)
    b2_ref: (1, F_out_p)             Linear2 bias (f32)
    o_ref : (TM, F_out_p)            output tile
    """
    f_out_p = w2_ref.shape[0]
    gelu = _gelu_tanh if approximate_gelu else _gelu_exact

    x = x_ref[...]

    # Fused MXU pass: main-path Linear1(+BN fold) and skip Linear share the input.
    t = jnp.dot(x, wa_ref[...], preferred_element_type=jnp.float32) + ba_ref[...]
    h = gelu(t[:, :f_out_p])          # main path (Dropout == identity in eval mode)
    skip = t[:, f_out_p:]             # skip path

    # Linear2 (+BN fold) + GELU (Dropout == identity, eval).
    h2 = jnp.dot(h.astype(w2_ref.dtype), w2_ref[...],
                 preferred_element_type=jnp.float32) + b2_ref[...]
    h2 = gelu(h2)

    o_ref[...] = (h2 + skip).astype(o_ref.dtype)


# ---------------------------------------------------------------------------
# One-time (cacheable) parameter preparation
# ---------------------------------------------------------------------------
def _fold_bn(w, b, gamma, beta, mean, var, eps):
    """Fold eval-mode BatchNorm1d into the preceding Linear (exact)."""
    scale = gamma / jnp.sqrt(var + eps)            # (F_out,)
    return w * scale[None, :], b * scale + (beta - mean * scale)


def prepare_residual_block_params(params, *, eps=1e-5, compute_dtype=jnp.bfloat16):
    """BN fold + lane padding + Linear1/skip concat + dtype cast.

    Call once and reuse the result across forward calls (this keeps the
    weight-prep traffic off the per-call critical path)."""
    f_in, f_out = params["w1"].shape

    w1f, b1f = _fold_bn(params["w1"], params["b1"],
                        params["bn1_gamma"], params["bn1_beta"],
                        params["bn1_mean"], params["bn1_var"], eps)
    w2f, b2f = _fold_bn(params["w2"], params["b2"],
                        params["bn2_gamma"], params["bn2_beta"],
                        params["bn2_mean"], params["bn2_var"], eps)

    w_skip = params.get("w_skip")
    if w_skip is None:                      # in_features == out_features -> Identity skip
        w_skip = jnp.eye(f_in, f_out, dtype=jnp.float32)
        b_skip = jnp.zeros((f_out,), jnp.float32)
    else:
        b_skip = params["b_skip"]

    f_in_p = _round_up(f_in, 128)
    f_out_p = _round_up(f_out, 128)

    def pad2(a, rows, cols):
        return jnp.pad(a, ((0, rows - a.shape[0]), (0, cols - a.shape[1])))

    wa = jnp.concatenate([pad2(w1f, f_in_p, f_out_p),
                          pad2(w_skip, f_in_p, f_out_p)], axis=1)       # (F_in_p, 2*F_out_p)
    ba = jnp.concatenate([jnp.pad(b1f, (0, f_out_p - f_out)),
                          jnp.pad(b_skip, (0, f_out_p - f_out))])[None, :]
    w2c = pad2(w2f, f_out_p, f_out_p)                                   # (F_out_p, F_out_p)
    b2c = jnp.pad(b2f, (0, f_out_p - f_out))[None, :]

    return dict(
        wa=wa.astype(compute_dtype), ba=ba.astype(jnp.float32),
        w2=w2c.astype(compute_dtype), b2=b2c.astype(jnp.float32),
        f_in=f_in, f_out=f_out, f_in_p=f_in_p, f_out_p=f_out_p)


# ---------------------------------------------------------------------------
# Per-generation tiling / VMEM planning
# ---------------------------------------------------------------------------
@functools.lru_cache(maxsize=1)
def _vmem_capacity_bytes():
    try:
        info = pltpu.get_tpu_info()
        for attr in ("vmem_capacity_bytes", "vmem_size_bytes", "vmem_bytes"):
            v = getattr(info, attr, None)
            if isinstance(v, int) and v > 0:
                return v
    except Exception:
        pass
    return 64 << 20                                  # conservative (v7x per-TC)


def _plan_tiling(n, f_in_p, f_out_p, in_isz, out_isz):
    vmem_cap = _vmem_capacity_bytes()
    if vmem_cap >= (100 << 20):                      # v5e / v6e: 128 MiB physical VMEM
        tm_target, limit_cap = 512, (100 << 20)
    else:                                            # v7x: 64 MiB per TensorCore
        tm_target, limit_cap = 256, (52 << 20)

    gran = 16 if in_isz < 4 else 8                   # bf16 packs 16 rows per vreg
    if n <= 2 * gran:
        tm = _round_up(max(n, 8), 8)                 # tiny batch: single tile
    else:
        # >=2 grid steps for moderate batches (keeps both v7x TensorCores fed).
        tm = min(tm_target, _round_up(pl.cdiv(n, 2), gran))

    def vmem_needed(tm_):
        # resident weights/biases (budgeted at 2 buffers to stay safe if the
        # single-buffer request is not honored)
        resident = 2 * ((f_in_p * 2 * f_out_p + f_out_p * f_out_p) * in_isz
                        + 3 * f_out_p * 4)
        # double-buffered streaming x / out tiles
        stream = 2 * tm_ * f_in_p * in_isz + 2 * tm_ * f_out_p * out_isz
        # in-kernel intermediates: t (f32, 2*F wide), gelu(h) f32, h cast, h2 f32
        interm = tm_ * f_out_p * (2 * 4 + 4 + in_isz + 4)
        return resident + stream + interm

    # Shrink the batch tile until everything (incl. f32 intermediates) fits.
    # TODO(synk): for very large F_in/F_out where the fused weights cannot stay
    #             VMEM-resident (v7x 64 MiB), stream weight tiles over an
    #             output-feature grid axis instead of shrinking TM further.
    while tm > 2 * gran and vmem_needed(tm) + (2 << 20) > limit_cap:
        tm = _round_up(tm // 2, gran)

    vmem_limit = int(min(limit_cap, max(vmem_needed(tm) + (2 << 20), 16 << 20)))
    return tm, vmem_limit


# ---------------------------------------------------------------------------
# Forward wrapper
# ---------------------------------------------------------------------------
def residual_block_forward(x, prep, *, out_dtype=jnp.float32, approximate_gelu=False):
    """x: (N, F_in).  prep: output of prepare_residual_block_params (cache it)."""
    n, f_in = x.shape
    assert f_in == prep["f_in"], "input feature dim mismatch"
    f_out, f_in_p, f_out_p = prep["f_out"], prep["f_in_p"], prep["f_out_p"]
    wa, ba, w2c, b2c = prep["wa"], prep["ba"], prep["w2"], prep["b2"]

    compute_dtype = wa.dtype
    in_isz = jnp.dtype(compute_dtype).itemsize
    out_isz = jnp.dtype(out_dtype).itemsize

    # Only the feature (matmul-K) axis is zero-padded; the batch axis is NOT padded:
    # the grid uses cdiv(N, TM) and the trailing partial tile carries don't-care rows.
    xp = x.astype(compute_dtype)
    if f_in_p != f_in:
        xp = jnp.pad(xp, ((0, 0), (0, f_in_p - f_in)))

    tm, vmem_limit = _plan_tiling(n, f_in_p, f_out_p, in_isz, out_isz)
    grid = (pl.cdiv(n, tm),)

    flops = 2 * n * f_in_p * (2 * f_out_p) + 2 * n * f_out_p * f_out_p
    bytes_accessed = (n * f_in_p * in_isz + (wa.size + w2c.size) * in_isz
                      + (ba.size + b2c.size) * 4 + n * f_out_p * out_isz)
    cost = pl.CostEstimate(flops=int(flops),
                           transcendentals=int(2 * n * f_out_p),
                           bytes_accessed=int(bytes_accessed))

    kernel = functools.partial(residual_block_kernel,
                               approximate_gelu=approximate_gelu)

    def _resident_spec(shape, single_buffer):
        # Constant index_map -> weights stay VMEM-resident; single-buffer them to
        # halve their footprint (double-buffering a never-changing block is waste).
        if single_buffer and hasattr(pl, "Buffered"):
            return pl.BlockSpec(shape, lambda i: (0, 0), pipeline_mode=pl.Buffered(1))
        return pl.BlockSpec(shape, lambda i: (0, 0))

    def _run(single_buffer_weights):
        return pl.pallas_call(
            kernel,
            out_shape=jax.ShapeDtypeStruct((n, f_out_p), out_dtype),
            grid=grid,
            in_specs=[
                pl.BlockSpec((tm, f_in_p), lambda i: (i, 0)),            # x tile (streamed)
                _resident_spec((f_in_p, 2 * f_out_p), single_buffer_weights),
                _resident_spec((1, 2 * f_out_p), single_buffer_weights),
                _resident_spec((f_out_p, f_out_p), single_buffer_weights),
                _resident_spec((1, f_out_p), single_buffer_weights),
            ],
            out_specs=pl.BlockSpec((tm, f_out_p), lambda i: (i, 0)),
            compiler_params=pltpu.CompilerParams(
                dimension_semantics=("parallel",),
                vmem_limit_bytes=vmem_limit),
            cost_estimate=cost,
        )(xp, wa, ba, w2c, b2c)

    try:
        out_p = _run(True)
    except Exception:
        # Fallback if pl.Buffered(1) / pipeline_mode is rejected by this jax version.
        out_p = _run(False)

    return out_p if f_out_p == f_out else out_p[:, :f_out]


# ---------------------------------------------------------------------------
# Synthetic params + pure-JAX reference
# ---------------------------------------------------------------------------
def make_params(key, in_features, out_features):
    """Deterministic synthetic parameters (PyTorch-Linear-like uniform init) and
    raw BatchNorm1d affine + running statistics (eval mode)."""
    ks = jax.random.split(key, 14)

    def lin_init(kw, kb, fan_in, fan_out):
        bound = 1.0 / (fan_in ** 0.5)
        w = jax.random.uniform(kw, (fan_in, fan_out), jnp.float32, -bound, bound)
        b = jax.random.uniform(kb, (fan_out,), jnp.float32, -bound, bound)
        return w, b

    w1, b1 = lin_init(ks[0], ks[1], in_features, out_features)
    w2, b2 = lin_init(ks[2], ks[3], out_features, out_features)
    wsk, bsk = lin_init(ks[4], ks[5], in_features, out_features)

    def bn_init(kg, kb_, km, kv):
        gamma = 1.0 + 0.1 * jax.random.normal(kg, (out_features,), jnp.float32)
        beta = 0.1 * jax.random.normal(kb_, (out_features,), jnp.float32)
        mean = 0.1 * jax.random.normal(km, (out_features,), jnp.float32)
        var = jnp.abs(1.0 + 0.1 * jax.random.normal(kv, (out_features,), jnp.float32))
        return gamma, beta, mean, var

    g1, be1, m1, v1 = bn_init(ks[6], ks[7], ks[8], ks[9])
    g2, be2, m2, v2 = bn_init(ks[10], ks[11], ks[12], ks[13])

    return dict(
        w1=w1, b1=b1, bn1_gamma=g1, bn1_beta=be1, bn1_mean=m1, bn1_var=v1,
        w2=w2, b2=b2, bn2_gamma=g2, bn2_beta=be2, bn2_mean=m2, bn2_var=v2,
        w_skip=wsk, b_skip=bsk,
    )


def reference_forward(x, p, eps=1e-5):
    """Plain-JAX reference of the same eval-mode forward (un-folded BN)."""
    def bn(h, g, b, m, v):
        return (h - m) / jnp.sqrt(v + eps) * g + b

    def gelu(h):
        return 0.5 * h * (1.0 + jax.lax.erf(h / jnp.sqrt(2.0)))

    h = x @ p["w1"] + p["b1"]
    h = gelu(bn(h, p["bn1_gamma"], p["bn1_beta"], p["bn1_mean"], p["bn1_var"]))
    h = h @ p["w2"] + p["b2"]
    h = gelu(bn(h, p["bn2_gamma"], p["bn2_beta"], p["bn2_mean"], p["bn2_var"]))
    return h + (x @ p["w_skip"] + p["b_skip"])


if __name__ == "__main__":
    in_features, out_features = 32, 64
    key = jax.random.PRNGKey(0)
    kx1, kx2, kp = jax.random.split(key, 3)

    params = make_params(kp, in_features, out_features)
    x_small = jax.random.normal(kx1, (8, in_features), jnp.float32)
    x_big = jax.random.normal(kx2, (200, in_features), jnp.float32)

    ref_small = reference_forward(x_small, params)
    ref_big = reference_forward(x_big, params)

    # Exact-f32 matmul path: must match the (un-folded) reference tightly.
    prep_f32 = prepare_residual_block_params(params, compute_dtype=jnp.float32)
    out_f32 = jax.block_until_ready(residual_block_forward(x_small, prep_f32))
    assert out_f32.shape == (8, out_features)
    assert jnp.allclose(out_f32, ref_small, atol=1e-4, rtol=1e-4), "f32 mismatch vs reference"

    # Default bf16-MXU path (f32 accumulation + f32 epilogue); prep is cached/reused.
    prep_bf16 = prepare_residual_block_params(params)     # compute_dtype = bfloat16 default
    out_bf16 = jax.block_until_ready(residual_block_forward(x_small, prep_bf16))
    assert out_bf16.shape == (8, out_features)
    assert float(jnp.max(jnp.abs(out_bf16 - ref_small))) < 0.25, "bf16 mismatch vs reference"

    # Larger, non-tile-multiple batch: exercises >=2 grid steps, the trailing
    # partial tile (no batch pad / crop) and the bf16-output path.
    out_big = jax.block_until_ready(
        residual_block_forward(x_big, prep_bf16, out_dtype=jnp.bfloat16))
    assert out_big.shape == (200, out_features)
    assert float(jnp.max(jnp.abs(out_big.astype(jnp.float32) - ref_big))) < 0.25, \
        "big-batch bf16 mismatch vs reference"

    print("KERNEL_OK")
</pallas_src>

<mosaic_0001>
module attributes {stable_mosaic.version = 11 : i64} {
  func.func @residual_block_kernel(%arg0: i32, %arg1: memref<8x128xf32, #tpu.memory_space<vmem>>, %arg2: memref<128x256xf32, #tpu.memory_space<vmem>>, %arg3: memref<1x256xf32, #tpu.memory_space<vmem>>, %arg4: memref<128x128xf32, #tpu.memory_space<vmem>>, %arg5: memref<1x128xf32, #tpu.memory_space<vmem>>, %arg6: memref<8x128xf32, #tpu.memory_space<vmem>>) attributes {dimension_semantics = [#tpu.dimension_semantics<parallel>], iteration_bounds = array<i64: 1>, scalar_prefetch = 0 : i64, scratch_operands = 0 : i64, tpu.core_type = #tpu.core_type<tc>, window_params = [{transform_indices = @transform_0, window_bounds = array<i64: 8, 128>}, {pipeline_mode = #tpu.pipeline_mode<synchronous>, transform_indices = @transform_1, window_bounds = array<i64: 128, 256>}, {pipeline_mode = #tpu.pipeline_mode<synchronous>, transform_indices = @transform_2, window_bounds = array<i64: 1, 256>}, {pipeline_mode = #tpu.pipeline_mode<synchronous>, transform_indices = @transform_3, window_bounds = array<i64: 128, 128>}, {pipeline_mode = #tpu.pipeline_mode<synchronous>, transform_indices = @transform_4, window_bounds = array<i64: 1, 128>}, {transform_indices = @transform_5, window_bounds = array<i64: 8, 128>}]} {
    %c0 = arith.constant 0 : index
    %c0_0 = arith.constant 0 : index
    %0 = vector.load %arg1[%c0, %c0_0] : memref<8x128xf32, #tpu.memory_space<vmem>>, vector<8x128xf32>
    %c0_1 = arith.constant 0 : index
    %c0_2 = arith.constant 0 : index
    %1 = vector.load %arg2[%c0_1, %c0_2] : memref<128x256xf32, #tpu.memory_space<vmem>>, vector<128x256xf32>
    %cst = arith.constant dense<0.000000e+00> : vector<8x256xf32>
    %2 = tpu.matmul %0, %1, %cst {dimension_numbers = #tpu.dot_dimension_numbers<[1], [0], [0], [1], [0, 0, 1, 1], [], []>} : vector<8x128xf32>, vector<128x256xf32>, vector<8x256xf32> -> vector<8x256xf32>
    %c0_3 = arith.constant 0 : index
    %c0_4 = arith.constant 0 : index
    %3 = vector.load %arg3[%c0_3, %c0_4] : memref<1x256xf32, #tpu.memory_space<vmem>>, vector<1x256xf32>
    %4 = vector.broadcast %3 : vector<1x256xf32> to vector<8x256xf32>
    %5 = arith.addf %2, %4 : vector<8x256xf32>
    %6 = vector.extract_strided_slice %5 {offsets = [0, 0], sizes = [8, 128], strides = [1, 1]} : vector<8x256xf32> to vector<8x128xf32>
    %cst_5 = arith.constant 5.000000e-01 : f32
    %7 = vector.broadcast %cst_5 : f32 to vector<8x128xf32>
    %8 = arith.mulf %7, %6 : vector<8x128xf32>
    %cst_6 = arith.constant 0.707106769 : f32
    %9 = vector.broadcast %cst_6 : f32 to vector<8x128xf32>
    %10 = arith.mulf %6, %9 : vector<8x128xf32>
    %11 = math.erf %10 : vector<8x128xf32>
    %cst_7 = arith.constant 1.000000e+00 : f32
    %12 = vector.broadcast %cst_7 : f32 to vector<8x128xf32>
    %13 = arith.addf %12, %11 : vector<8x128xf32>
    %14 = arith.mulf %8, %13 : vector<8x128xf32>
    %15 = vector.extract_strided_slice %5 {offsets = [0, 128], sizes = [8, 128], strides = [1, 1]} : vector<8x256xf32> to vector<8x128xf32>
    %c0_8 = arith.constant 0 : index
    %c0_9 = arith.constant 0 : index
    %16 = vector.load %arg4[%c0_8, %c0_9] : memref<128x128xf32, #tpu.memory_space<vmem>>, vector<128x128xf32>
    %cst_10 = arith.constant dense<0.000000e+00> : vector<8x128xf32>
    %17 = tpu.matmul %14, %16, %cst_10 {dimension_numbers = #tpu.dot_dimension_numbers<[1], [0], [0], [1], [0, 0, 1, 1], [], []>} : vector<8x128xf32>, vector<128x128xf32>, vector<8x128xf32> -> vector<8x128xf32>
    %c0_11 = arith.constant 0 : index
    %c0_12 = arith.constant 0 : index
    %18 = vector.load %arg5[%c0_11, %c0_12] : memref<1x128xf32, #tpu.memory_space<vmem>>, vector<1x128xf32>
    %19 = vector.broadcast %18 : vector<1x128xf32> to vector<8x128xf32>
    %20 = arith.addf %17, %19 : vector<8x128xf32>
    %cst_13 = arith.constant 5.000000e-01 : f32
    %21 = vector.broadcast %cst_13 : f32 to vector<8x128xf32>
    %22 = arith.mulf %21, %20 : vector<8x128xf32>
    %cst_14 = arith.constant 0.707106769 : f32
    %23 = vector.broadcast %cst_14 : f32 to vector<8x128xf32>
    %24 = arith.mulf %20, %23 : vector<8x128xf32>
    %25 = math.erf %24 : vector<8x128xf32>
    %cst_15 = arith.constant 1.000000e+00 : f32
    %26 = vector.broadcast %cst_15 : f32 to vector<8x128xf32>
    %27 = arith.addf %26, %25 : vector<8x128xf32>
    %28 = arith.mulf %22, %27 : vector<8x128xf32>
    %29 = arith.addf %28, %15 : vector<8x128xf32>
    %c0_16 = arith.constant 0 : index
    %c0_17 = arith.constant 0 : index
    %30 = vector.load %arg6[%c0_16, %c0_17] : memref<8x128xf32, #tpu.memory_space<vmem>>, vector<8x128xf32>
    tpu.vector_store %arg6[%c0_16, %c0_17], %29 {strides = array<i32>} : memref<8x128xf32, #tpu.memory_space<vmem>>, vector<8x128xf32>,
    return
  }
  func.func @transform_0(%arg0: i32) -> (i32, i32) {
    %c0_i32 = arith.constant 0 : i32
    %c0_i32_0 = arith.constant 0 : i32
    return %arg0, %c0_i32 : i32, i32
  }
  func.func @transform_1(%arg0: i32) -> (i32, i32) {
    %c0_i32 = arith.constant 0 : i32
    %c0_i32_0 = arith.constant 0 : i32
    %c0_i32_1 = arith.constant 0 : i32
    return %c0_i32, %c0_i32_0 : i32, i32
  }
  func.func @transform_2(%arg0: i32) -> (i32, i32) {
    %c0_i32 = arith.constant 0 : i32
    %c0_i32_0 = arith.constant 0 : i32
    %c0_i32_1 = arith.constant 0 : i32
    return %c0_i32, %c0_i32_0 : i32, i32
  }
  func.func @transform_3(%arg0: i32) -> (i32, i32) {
    %c0_i32 = arith.constant 0 : i32
    %c0_i32_0 = arith.constant 0 : i32
    %c0_i32_1 = arith.constant 0 : i32
    return %c0_i32, %c0_i32_0 : i32, i32
  }
  func.func @transform_4(%arg0: i32) -> (i32, i32) {
    %c0_i32 = arith.constant 0 : i32
    %c0_i32_0 = arith.constant 0 : i32
    %c0_i32_1 = arith.constant 0 : i32
    return %c0_i32, %c0_i32_0 : i32, i32
  }
  func.func @transform_5(%arg0: i32) -> (i32, i32) {
    %c0_i32 = arith.constant 0 : i32
    %c0_i32_0 = arith.constant 0 : i32
    return %arg0, %c0_i32 : i32, i32
  }
}

module attributes {stable_mosaic.version = 11 : i64} {
  func.func @residual_block_kernel(%arg0: i32, %arg1: memref<8x128xf32, #tpu.memory_space<vmem>>, %arg2: memref<128x256xf32, #tpu.memory_space<vmem>>, %arg3: memref<1x256xf32, #tpu.memory_space<vmem>>, %arg4: memref<128x128xf32, #tpu.memory_space<vmem>>, %arg5: memref<1x128xf32, #tpu.memory_space<vmem>>, %arg6: memref<8x128xf32, #tpu.memory_space<vmem>>) attributes {dimension_semantics = [#tpu.dimension_semantics<parallel>], iteration_bounds = array<i64: 1>, scalar_prefetch = 0 : i64, scratch_operands = 0 : i64, tpu.core_type = #tpu.core_type<tc>, window_params = [{transform_indices = @transform_0, window_bounds = array<i64: 8, 128>}, {pipeline_mode = #tpu.pipeline_mode<synchronous>, transform_indices = @transform_1, window_bounds = array<i64: 128, 256>}, {pipeline_mode = #tpu.pipeline_mode<synchronous>, transform_indices = @transform_2, window_bounds = array<i64: 1, 256>}, {pipeline_mode = #tpu.pipeline_mode<synchronous>, transform_indices = @transform_3, window_bounds = array<i64: 128, 128>}, {pipeline_mode = #tpu.pipeline_mode<synchronous>, transform_indices = @transform_4, window_bounds = array<i64: 1, 128>}, {transform_indices = @transform_5, window_bounds = array<i64: 8, 128>}]} {
    %c0 = arith.constant 0 : index
    %c0_0 = arith.constant 0 : index
    %0 = vector.load %arg1[%c0, %c0_0] : memref<8x128xf32, #tpu.memory_space<vmem>>, vector<8x128xf32>
    %c0_1 = arith.constant 0 : index
    %c0_2 = arith.constant 0 : index
    %1 = vector.load %arg2[%c0_1, %c0_2] : memref<128x256xf32, #tpu.memory_space<vmem>>, vector<128x256xf32>
    %cst = arith.constant dense<0.000000e+00> : vector<8x256xf32>
    %2 = tpu.matmul %0, %1, %cst {dimension_numbers = #tpu.dot_dimension_numbers<[1], [0], [0], [1], [0, 0, 1, 1], [], []>} : vector<8x128xf32>, vector<128x256xf32>, vector<8x256xf32> -> vector<8x256xf32>
    %c0_3 = arith.constant 0 : index
    %c0_4 = arith.constant 0 : index
    %3 = vector.load %arg3[%c0_3, %c0_4] : memref<1x256xf32, #tpu.memory_space<vmem>>, vector<1x256xf32>
    %4 = vector.broadcast %3 : vector<1x256xf32> to vector<8x256xf32>
    %5 = arith.addf %2, %4 : vector<8x256xf32>
    %6 = vector.extract_strided_slice %5 {offsets = [0, 0], sizes = [8, 128], strides = [1, 1]} : vector<8x256xf32> to vector<8x128xf32>
    %cst_5 = arith.constant 5.000000e-01 : f32
    %7 = vector.broadcast %cst_5 : f32 to vector<8x128xf32>
    %8 = arith.mulf %7, %6 : vector<8x128xf32>
    %cst_6 = arith.constant 0.707106769 : f32
    %9 = vector.broadcast %cst_6 : f32 to vector<8x128xf32>
    %10 = arith.mulf %6, %9 : vector<8x128xf32>
    %11 = math.erf %10 : vector<8x128xf32>
    %cst_7 = arith.constant 1.000000e+00 : f32
    %12 = vector.broadcast %cst_7 : f32 to vector<8x128xf32>
    %13 = arith.addf %12, %11 : vector<8x128xf32>
    %14 = arith.mulf %8, %13 : vector<8x128xf32>
    %15 = vector.extract_strided_slice %5 {offsets = [0, 128], sizes = [8, 128], strides = [1, 1]} : vector<8x256xf32> to vector<8x128xf32>
    %c0_8 = arith.constant 0 : index
    %c0_9 = arith.constant 0 : index
    %16 = vector.load %arg4[%c0_8, %c0_9] : memref<128x128xf32, #tpu.memory_space<vmem>>, vector<128x128xf32>
    %cst_10 = arith.constant dense<0.000000e+00> : vector<8x128xf32>
    %17 = tpu.matmul %14, %16, %cst_10 {dimension_numbers = #tpu.dot_dimension_numbers<[1], [0], [0], [1], [0, 0, 1, 1], [], []>} : vector<8x128xf32>, vector<128x128xf32>, vector<8x128xf32> -> vector<8x128xf32>
    %c0_11 = arith.constant 0 : index
    %c0_12 = arith.constant 0 : index
    %18 = vector.load %arg5[%c0_11, %c0_12] : memref<1x128xf32, #tpu.memory_space<vmem>>, vector<1x128xf32>
    %19 = vector.broadcast %18 : vector<1x128xf32> to vector<8x128xf32>
    %20 = arith.addf %17, %19 : vector<8x128xf32>
    %cst_13 = arith.constant 5.000000e-01 : f32
    %21 = vector.broadcast %cst_13 : f32 to vector<8x128xf32>
    %22 = arith.mulf %21, %20 : vector<8x128xf32>
    %cst_14 = arith.constant 0.707106769 : f32
    %23 = vector.broadcast %cst_14 : f32 to vector<8x128xf32>
    %24 = arith.mulf %20, %23 : vector<8x128xf32>
    %25 = math.erf %24 : vector<8x128xf32>
    %cst_15 = arith.constant 1.000000e+00 : f32
    %26 = vector.broadcast %cst_15 : f32 to vector<8x128xf32>
    %27 = arith.addf %26, %25 : vector<8x128xf32>
    %28 = arith.mulf %22, %27 : vector<8x128xf32>
    %29 = arith.addf %28, %15 : vector<8x128xf32>
    %c0_16 = arith.constant 0 : index
    %c0_17 = arith.constant 0 : index
    %30 = vector.load %arg6[%c0_16, %c0_17] : memref<8x128xf32, #tpu.memory_space<vmem>>, vector<8x128xf32>
    tpu.vector_store %arg6[%c0_16, %c0_17], %29 {strides = array<i32>} : memref<8x128xf32, #tpu.memory_space<vmem>>, vector<8x128xf32>,
    return
  }
  func.func @transform_0(%arg0: i32) -> (i32, i32) {
    %c0_i32 = arith.constant 0 : i32
    %c0_i32_0 = arith.constant 0 : i32
    return %arg0, %c0_i32 : i32, i32
  }
  func.func @transform_1(%arg0: i32) -> (i32, i32) {
    %c0_i32 = arith.constant 0 : i32
    %c0_i32_0 = arith.constant 0 : i32
    %c0_i32_1 = arith.constant 0 : i32
    return %c0_i32, %c0_i32_0 : i32, i32
  }
  func.func @transform_2(%arg0: i32) -> (i32, i32) {
    %c0_i32 = arith.constant 0 : i32
    %c0_i32_0 = arith.constant 0 : i32
    %c0_i32_1 = arith.constant 0 : i32
    return %c0_i32, %c0_i32_0 : i32, i32
  }
  func.func @transform_3(%arg0: i32) -> (i32, i32) {
    %c0_i32 = arith.constant 0 : i32
    %c0_i32_0 = arith.constant 0 : i32
    %c0_i32_1 = arith.constant 0 : i32
    return %c0_i32, %c0_i32_0 : i32, i32
  }
  func.func @transform_4(%arg0: i32) -> (i32, i32) {
    %c0_i32 = arith.constant 0 : i32
    %c0_i32_0 = arith.constant 0 : i32
    %c0_i32_1 = arith.constant 0 : i32
    return %c0_i32, %c0_i32_0 : i32, i32
  }
  func.func @transform_5(%arg0: i32) -> (i32, i32) {
    %c0_i32 = arith.constant 0 : i32
    %c0_i32_0 = arith.constant 0 : i32
    return %arg0, %c0_i32 : i32, i32
  }
}

</mosaic_0001>

<llo_original>
// kernel: tpu_custom_call.1
$region0: #{tpu_custom_call.1}
  #allocation0 [shape = 'u32[]', space=smem, size = 0x4, offset = 0x4, fixed_abs, tag = 'smem constant byte address 0x4 - core index']
  #allocation1 [shape = 'u32[144,128]{1,0:T(1,128)}', space=vmem, size = 0x12000, scoped, tag = 'internal scratch']
  %s0 = inlined_call_operand.hbm [shape: f32[8,128], index: 0, kind: input, shape index: {}]
  %s1 = inlined_call_operand.hbm [shape: f32[128,256], index: 1, kind: input, shape index: {}]
  %s2 = inlined_call_operand.vmem [shape: f32[1,256], index: 2, kind: input, shape index: {}]
  %s3 = inlined_call_operand.hbm [shape: f32[128,128], index: 3, kind: input, shape index: {}]
  %s4 = inlined_call_operand.vmem [shape: f32[1,128], index: 4, kind: input, shape index: {}]
  %s5 = inlined_call_operand.hbm [shape: f32[8,128], index: 5, kind: output, shape index: {}]
  %s6 = sld [smem:[#allocation0]]
  $region42: #{tpu_custom_call.1} parent=0
    _
  %s8 = ssub.s32 1, %s6
  %s9 = scalar_select 0, %s8, %s6
  $region1: #{tpu_custom_call.1} parent=0
    #allocation2 [shape = 'u8[4096]{0}', space=vmem, size = 0x1000, scoped, tag = 'input window, operand 0, single buffered']
    #allocation3 [shape = 's32[1]{0}', space=sflag, size = 0x4, scoped, tag = 'scoped memory for tpu_custom_call.1']
    #allocation4 [shape = 's32[1]{0}', space=sflag, size = 0x4, scoped, tag = 'scoped memory for tpu_custom_call.1']
    #allocation5 [shape = 'u8[131072]{0}', space=vmem, size = 0x20000, scoped, tag = 'input window, operand 1, single buffered']
    #allocation6 [shape = 's32[1]{0}', space=sflag, size = 0x4, scoped, tag = 'scoped memory for tpu_custom_call.1']
    #allocation7 [shape = 'u8[65536]{0}', space=vmem, size = 0x10000, scoped, tag = 'input window, operand 3, single buffered']
    #allocation8 [shape = 'u8[4096]{0}', space=vmem, size = 0x1000, scoped, tag = 'output window, operand 0, single buffered']
    %10 = vsyncpa [#allocation3], 0
    %11 = vsyncpa [#allocation6], 0
    %12 = vsyncpa [#allocation4], 0
    // Predicated region
    $region2: #{tpu_custom_call.1} parent=1 // pred_check
      _
    $region3: #{tpu_custom_call.1} parent=1 // pred_check_branch
      %14 = sbr.rel (0) target = $region5
    $region4: #{tpu_custom_call.1} parent=1 // pred_region
      %s16 = ssub.s32 128, 128
      %17 = vsyncadd [#allocation3], %s16
      %s19 = sshll.u32 [#allocation2], 4
      %s20 = int_to_ptr.vmem [resolvable:$true] %s19
      %22 = dma.hbm_to_vmem [thread:$0]  %s0, 128, %s20, [#allocation3]
    $region5: #{tpu_custom_call.1} parent=1 // pred_fallthru
      _
    // Predicated region
    $region6: #{tpu_custom_call.1} parent=1 // pred_check
      _
    $region7: #{tpu_custom_call.1} parent=1 // pred_check_branch
      %24 = sbr.rel (0) target = $region9
    $region8: #{tpu_custom_call.1} parent=1 // pred_region
      %s26 = ssub.s32 4096, 4096
      %27 = vsyncadd [#allocation6], %s26
      %s28 = sshll.u32 [#allocation5], 4
      %s29 = int_to_ptr.vmem [resolvable:$true] %s28
      %34 = dma.hbm_to_vmem [thread:$0]  %s1, 4096, %s29, [#allocation6], 256, 256, 16
    $region9: #{tpu_custom_call.1} parent=1 // pred_fallthru
      _
    // Predicated region
    $region10: #{tpu_custom_call.1} parent=1 // pred_check
      _
    $region11: #{tpu_custom_call.1} parent=1 // pred_check_branch
      %36 = sbr.rel (0) target = $region13
    $region12: #{tpu_custom_call.1} parent=1 // pred_region
      _
    $region13: #{tpu_custom_call.1} parent=1 // pred_fallthru
      _
    // Predicated region
    $region14: #{tpu_custom_call.1} parent=1 // pred_check
      _
    $region15: #{tpu_custom_call.1} parent=1 // pred_check_branch
      %38 = sbr.rel (0) target = $region17
    $region16: #{tpu_custom_call.1} parent=1 // pred_region
      %s40 = ssub.s32 2048, 2048
      %41 = vsyncadd [#allocation6], %s40
      %s42 = sshll.u32 [#allocation7], 4
      %s43 = int_to_ptr.vmem [resolvable:$true] %s42
      %48 = dma.hbm_to_vmem [thread:$0]  %s3, 2048, %s43, [#allocation6], 128, 128, 8
    $region17: #{tpu_custom_call.1} parent=1 // pred_fallthru
      _
    // Predicated region
    $region18: #{tpu_custom_call.1} parent=1 // pred_check
      _
    $region19: #{tpu_custom_call.1} parent=1 // pred_check_branch
      %50 = sbr.rel (0) target = $region21
    $region20: #{tpu_custom_call.1} parent=1 // pred_region
      _
    $region21: #{tpu_custom_call.1} parent=1 // pred_fallthru
      _
    // Predicated region
    $region22: #{tpu_custom_call.1} parent=1 // pred_check
      _
    $region23: #{tpu_custom_call.1} parent=1 // pred_check_branch
      %52 = sbr.rel (0) target = $region25
    $region24: #{tpu_custom_call.1} parent=1 // pred_region
      %53 = dma.done [#allocation3], 128
    $region25: #{tpu_custom_call.1} parent=1 // pred_fallthru
      _
    // Predicated region
    $region26: #{tpu_custom_call.1} parent=1 // pred_check
      _
    $region27: #{tpu_custom_call.1} parent=1 // pred_check_branch
      %55 = sbr.rel (0) target = $region29
    $region28: #{tpu_custom_call.1} parent=1 // pred_region
      %56 = dma.done [#allocation6], 4096
    $region29: #{tpu_custom_call.1} parent=1 // pred_fallthru
      _
    // Predicated region
    $region30: #{tpu_custom_call.1} parent=1 // pred_check
      _
    $region31: #{tpu_custom_call.1} parent=1 // pred_check_branch
      %58 = sbr.rel (0) target = $region33
    $region32: #{tpu_custom_call.1} parent=1 // pred_region
      %59 = dma.done [#allocation6], 2048
    $region33: #{tpu_custom_call.1} parent=1 // pred_fallthru
      _
    %v60 = vld [vmem:[#allocation2] sm:$0xff]
    %v61 = vld [vmem:[#allocation5] sm:$0xff]
    %v62 = vld [vmem:[#allocation5 + $0x8] sm:$0xff]
    %v63 = vld [vmem:[#allocation5 + $0x10] sm:$0xff]
    %v64 = vld [vmem:[#allocation5 + $0x18] sm:$0xff]
    %v65 = vld [vmem:[#allocation5 + $0x20] sm:$0xff]
    %v66 = vld [vmem:[#allocation5 + $0x28] sm:$0xff]
    %v67 = vld [vmem:[#allocation5 + $0x30] sm:$0xff]
    %v68 = vld [vmem:[#allocation5 + $0x38] sm:$0xff]
    %v69 = vld [vmem:[#allocation5 + $0x40] sm:$0xff]
    %v70 = vld [vmem:[#allocation5 + $0x48] sm:$0xff]
    %v71 = vld [vmem:[#allocation5 + $0x50] sm:$0xff]
    %v72 = vld [vmem:[#allocation5 + $0x58] sm:$0xff]
    %v73 = vld [vmem:[#allocation5 + $0x60] sm:$0xff]
    %v74 = vld [vmem:[#allocation5 + $0x68] sm:$0xff]
    %v75 = vld [vmem:[#allocation5 + $0x70] sm:$0xff]
    %v76 = vld [vmem:[#allocation5 + $0x78] sm:$0xff]
    %v77 = vld [vmem:[#allocation5 + $0x80] sm:$0xff]
    %v78 = vld [vmem:[#allocation5 + $0x88] sm:$0xff]
    %v79 = vld [vmem:[#allocation5 + $0x90] sm:$0xff]
    %v80 = vld [vmem:[#allocation5 + $0x98] sm:$0xff]
    %v81 = vld [vmem:[#allocation5 + $0xa0] sm:$0xff]
    %v82 = vld [vmem:[#allocation5 + $0xa8] sm:$0xff]
    %v83 = vld [vmem:[#allocation5 + $0xb0] sm:$0xff]
    %v84 = vld [vmem:[#allocation5 + $0xb8] sm:$0xff]
    %v85 = vld [vmem:[#allocation5 + $0xc0] sm:$0xff]
    %v86 = vld [vmem:[#allocation5 + $0xc8] sm:$0xff]
    %v87 = vld [vmem:[#allocation5 + $0xd0] sm:$0xff]
    %v88 = vld [vmem:[#allocation5 + $0xd8] sm:$0xff]
    %v89 = vld [vmem:[#allocation5 + $0xe0] sm:$0xff]
    %v90 = vld [vmem:[#allocation5 + $0xe8] sm:$0xff]
    %v91 = vld [vmem:[#allocation5 + $0xf0] sm:$0xff]
    %v92 = vld [vmem:[#allocation5 + $0xf8] sm:$0xff]
    %v93 = vld [vmem:[%s2] sm:$0x3]
    %v95 = vlaneseq
    %v96 = vshrl.u32 %v95, 7
    %v97 = vsub.s32 0, %v96
    %v98 = vrot.slane %v93, %v97
    %v99 = vlaneseq
    %v100 = vshrl.u32 %v99, 7
    %v101 = vsub.s32 1, %v100
    %v102 = vrot.slane %v93, %v101
    %105 = vmatprep.subr.mxu0 %v62
    %106 = vmatpush1.msra.mxu0 %v61
    %107 = vmatprep.subr.mxu0 %v64
    %108 = vmatpush1.msra.mxu0 %v63
    %109 = vmatprep.subr.mxu0 %v66
    %110 = vmatpush1.msra.mxu0 %v65
    %111 = vmatprep.subr.mxu0 %v68
    %112 = vmatpush1.msra.mxu0 %v67
    %113 = vmatprep.subr.mxu0 %v70
    %114 = vmatpush1.msra.mxu0 %v69
    %115 = vmatprep.subr.mxu0 %v72
    %116 = vmatpush1.msra.mxu0 %v71
    %117 = vmatprep.subr.mxu0 %v74
    %118 = vmatpush1.msra.mxu0 %v73
    %119 = vmatprep.subr.mxu0 %v76
    %120 = vmatpush1.msra.mxu0 %v75
    %121 = vmatprep.subr.mxu0 %v78
    %122 = vmatpush1.msra.mxu0 %v77
    %123 = vmatprep.subr.mxu0 %v80
    %124 = vmatpush1.msra.mxu0 %v79
    %125 = vmatprep.subr.mxu0 %v82
    %126 = vmatpush1.msra.mxu0 %v81
    %127 = vmatprep.subr.mxu0 %v84
    %128 = vmatpush1.msra.mxu0 %v83
    %129 = vmatprep.subr.mxu0 %v86
    %130 = vmatpush1.msra.mxu0 %v85
    %131 = vmatprep.subr.mxu0 %v88
    %132 = vmatpush1.msra.mxu0 %v87
    %133 = vmatprep.subr.mxu0 %v90
    %134 = vmatpush1.msra.mxu0 %v89
    %135 = vmatprep.subr.mxu0 %v92
    %136 = vmatpush1.msra.mxu0 %v91
    %137 = vmatprep.subr.mxu0 0.0
    %138 = vmatpush1.msra.mxu0 0.0
    %139 = vmatprep.subr.mxu0 0.0
    %140 = vmatpush1.msra.mxu0 0.0
    %141 = vmatprep.subr.mxu0 0.0
    %142 = vmatpush1.msra.mxu0 0.0
    %143 = vmatprep.subr.mxu0 0.0
    %144 = vmatpush1.msra.mxu0 0.0
    %145 = vmatprep.subr.mxu0 0.0
    %146 = vmatpush1.msra.mxu0 0.0
    %147 = vmatprep.subr.mxu0 0.0
    %148 = vmatpush1.msra.mxu0 0.0
    %149 = vmatprep.subr.mxu0 0.0
    %150 = vmatpush1.msra.mxu0 0.0
    %151 = vmatprep.subr.mxu0 0.0
    %152 = vmatpush1.msra.mxu0 0.0
    %153 = vmatprep.subr.mxu0 0.0
    %154 = vmatpush1.msra.mxu0 0.0
    %155 = vmatprep.subr.mxu0 0.0
    %156 = vmatpush1.msra.mxu0 0.0
    %157 = vmatprep.subr.mxu0 0.0
    %158 = vmatpush1.msra.mxu0 0.0
    %159 = vmatprep.subr.mxu0 0.0
    %160 = vmatpush1.msra.mxu0 0.0
    %161 = vmatprep.subr.mxu0 0.0
    %162 = vmatpush1.msra.mxu0 0.0
    %163 = vmatprep.subr.mxu0 0.0
    %164 = vmatpush1.msra.mxu0 0.0
    %165 = vmatprep.subr.mxu0 0.0
    %166 = vmatpush1.msra.mxu0 0.0
    %167 = vmatprep.subr.mxu0 0.0
    %168 = vmatpush1.msra.mxu0 0.0
    %169 = vmatprep.mubr.f32.mxu0 0.0
    %170 = vmatmul.mubr.f32.gmra.mrb[0].mxu0 %v60
    %v171 = vpop.f32.mrb[0].mxu0
    %v172 = vadd.f32 %v98, %v171
    %v173 = vpop.f32.mrb[0].mxu0
    %v174 = vadd.f32 %v102, %v173
    %175 = vdwg.mxu0
    %v176 = vmul.f32 %v172, 0.5
    %v177 = vmul.f32 %v172, 0.70710677
    %v178 = verf.f32.pop %v177
    %v179 = vadd.f32 %v178, 1.0
    %v180 = vmul.f32 %v176, %v179
    %v181 = vld [vmem:[#allocation7] sm:$0xff]
    %v182 = vld [vmem:[#allocation7 + $0x8] sm:$0xff]
    %v183 = vld [vmem:[#allocation7 + $0x10] sm:$0xff]
    %v184 = vld [vmem:[#allocation7 + $0x18] sm:$0xff]
    %v185 = vld [vmem:[#allocation7 + $0x20] sm:$0xff]
    %v186 = vld [vmem:[#allocation7 + $0x28] sm:$0xff]
    %v187 = vld [vmem:[#allocation7 + $0x30] sm:$0xff]
    %v188 = vld [vmem:[#allocation7 + $0x38] sm:$0xff]
    %v189 = vld [vmem:[#allocation7 + $0x40] sm:$0xff]
    %v190 = vld [vmem:[#allocation7 + $0x48] sm:$0xff]
    %v191 = vld [vmem:[#allocation7 + $0x50] sm:$0xff]
    %v192 = vld [vmem:[#allocation7 + $0x58] sm:$0xff]
    %v193 = vld [vmem:[#allocation7 + $0x60] sm:$0xff]
    %v194 = vld [vmem:[#allocation7 + $0x68] sm:$0xff]
    %v195 = vld [vmem:[#allocation7 + $0x70] sm:$0xff]
    %v196 = vld [vmem:[#allocation7 + $0x78] sm:$0xff]
    %v197 = vld [vmem:[%s4] sm:$0x1]
    %v199 = vlaneseq
    %v200 = vshrl.u32 %v199, 7
    %v201 = vsub.s32 0, %v200
    %v202 = vrot.slane %v197, %v201
    %204 = vmatprep.subr.mxu0 0.0
    %205 = vmatpush1.msra.mxu0 %v181
    %206 = vmatprep.subr.mxu0 0.0
    %207 = vmatpush1.msra.mxu0 %v182
    %208 = vmatprep.subr.mxu0 0.0
    %209 = vmatpush1.msra.mxu0 %v183
    %210 = vmatprep.subr.mxu0 0.0
    %211 = vmatpush1.msra.mxu0 %v184
    %212 = vmatprep.subr.mxu0 0.0
    %213 = vmatpush1.msra.mxu0 %v185
    %214 = vmatprep.subr.mxu0 0.0
    %215 = vmatpush1.msra.mxu0 %v186
    %216 = vmatprep.subr.mxu0 0.0
    %217 = vmatpush1.msra.mxu0 %v187
    %218 = vmatprep.subr.mxu0 0.0
    %219 = vmatpush1.msra.mxu0 %v188
    %220 = vmatprep.subr.mxu0 0.0
    %221 = vmatpush1.msra.mxu0 %v189
    %222 = vmatprep.subr.mxu0 0.0
    %223 = vmatpush1.msra.mxu0 %v190
    %224 = vmatprep.subr.mxu0 0.0
    %225 = vmatpush1.msra.mxu0 %v191
    %226 = vmatprep.subr.mxu0 0.0
    %227 = vmatpush1.msra.mxu0 %v192
    %228 = vmatprep.subr.mxu0 0.0
    %229 = vmatpush1.msra.mxu0 %v193
    %230 = vmatprep.subr.mxu0 0.0
    %231 = vmatpush1.msra.mxu0 %v194
    %232 = vmatprep.subr.mxu0 0.0
    %233 = vmatpush1.msra.mxu0 %v195
    %234 = vmatprep.subr.mxu0 0.0
    %235 = vmatpush1.msra.mxu0 %v196
    %236 = vmatprep.subr.mxu0 0.0
    %237 = vmatpush1.msra.mxu0 0.0
    %238 = vmatprep.subr.mxu0 0.0
    %239 = vmatpush1.msra.mxu0 0.0
    %240 = vmatprep.subr.mxu0 0.0
    %241 = vmatpush1.msra.mxu0 0.0
    %242 = vmatprep.subr.mxu0 0.0
    %243 = vmatpush1.msra.mxu0 0.0
    %244 = vmatprep.subr.mxu0 0.0
    %245 = vmatpush1.msra.mxu0 0.0
    %246 = vmatprep.subr.mxu0 0.0
    %247 = vmatpush1.msra.mxu0 0.0
    %248 = vmatprep.subr.mxu0 0.0
    %249 = vmatpush1.msra.mxu0 0.0
    %250 = vmatprep.subr.mxu0 0.0
    %251 = vmatpush1.msra.mxu0 0.0
    %252 = vmatprep.subr.mxu0 0.0
    %253 = vmatpush1.msra.mxu0 0.0
    %254 = vmatprep.subr.mxu0 0.0
    %255 = vmatpush1.msra.mxu0 0.0
    %256 = vmatprep.subr.mxu0 0.0
    %257 = vmatpush1.msra.mxu0 0.0
    %258 = vmatprep.subr.mxu0 0.0
    %259 = vmatpush1.msra.mxu0 0.0
    %260 = vmatprep.subr.mxu0 0.0
    %261 = vmatpush1.msra.mxu0 0.0
    %262 = vmatprep.subr.mxu0 0.0
    %263 = vmatpush1.msra.mxu0 0.0
    %264 = vmatprep.subr.mxu0 0.0
    %265 = vmatpush1.msra.mxu0 0.0
    %266 = vmatprep.subr.mxu0 0.0
    %267 = vmatpush1.msra.mxu0 0.0
    %268 = vmatprep.mubr.f32.mxu0 0.0
    %269 = vmatmul.mubr.f32.gmra.mrb[0].mxu0 %v180
    %v270 = vpop.f32.mrb[0].mxu0
    %v271 = vadd.f32 %v202, %v270
    %v272 = vpop.f32.mrb[0].mxu0
    %273 = vdwg.mxu0
    %v274 = vmul.f32 %v271, 0.5
    %v275 = vmul.f32 %v271, 0.70710677
    %v276 = verf.f32.pop %v275
    %v277 = vadd.f32 %v276, 1.0
    %v278 = vmul.f32 %v274, %v277
    %v279 = vadd.f32 %v278, %v174
    %280 = vst [vmem:[#allocation8] sm:$0xff] %v279
    // Predicated region
    $region34: #{tpu_custom_call.1} parent=1 // pred_check
      _
    $region35: #{tpu_custom_call.1} parent=1 // pred_check_branch
      %282 = sbr.rel (0) target = $region37
    $region36: #{tpu_custom_call.1} parent=1 // pred_region
      %s284 = ssub.s32 128, 128
      %285 = vsyncadd [#allocation4], %s284
      %s287 = sshll.u32 [#allocation8], 4
      %s288 = int_to_ptr.vmem [resolvable:$true] %s287
      %290 = dma.vmem_to_hbm [thread:$0]  %s288, 128, %s5, [#allocation4]
    $region37: #{tpu_custom_call.1} parent=1 // pred_fallthru
      _
    // Predicated region
    $region38: #{tpu_custom_call.1} parent=1 // pred_check
      _
    $region39: #{tpu_custom_call.1} parent=1 // pred_check_branch
      %292 = sbr.rel (0) target = $region41
    $region40: #{tpu_custom_call.1} parent=1 // pred_region
      %293 = dma.done [#allocation4], 128
    $region41: #{tpu_custom_call.1} parent=1 // pred_fallthru
      _
    %294 = vsyncpa [#allocation3], 1
    %295 = vsyncpa [#allocation6], 1
    %296 = vsyncpa [#allocation4], 1

// kernel: tpu_custom_call.1
$region0: #{tpu_custom_call.1}
  #allocation0 [shape = 'u32[]', space=smem, size = 0x4, offset = 0x4, fixed_abs, tag = 'smem constant byte address 0x4 - core index']
  #allocation1 [shape = 'u32[144,128]{1,0:T(1,128)}', space=vmem, size = 0x12000, scoped, tag = 'internal scratch']
  %s0 = inlined_call_operand.hbm [shape: f32[8,128], index: 0, kind: input, shape index: {}]
  %s1 = inlined_call_operand.hbm [shape: f32[128,256], index: 1, kind: input, shape index: {}]
  %s2 = inlined_call_operand.vmem [shape: f32[1,256], index: 2, kind: input, shape index: {}]
  %s3 = inlined_call_operand.hbm [shape: f32[128,128], index: 3, kind: input, shape index: {}]
  %s4 = inlined_call_operand.vmem [shape: f32[1,128], index: 4, kind: input, shape index: {}]
  %s5 = inlined_call_operand.hbm [shape: f32[8,128], index: 5, kind: output, shape index: {}]
  %s6 = sld [smem:[#allocation0]]
  $region42: #{tpu_custom_call.1} parent=0
    _
  %s8 = ssub.s32 1, %s6
  %s9 = scalar_select 0, %s8, %s6
  $region1: #{tpu_custom_call.1} parent=0
    #allocation2 [shape = 'u8[4096]{0}', space=vmem, size = 0x1000, scoped, tag = 'input window, operand 0, single buffered']
    #allocation3 [shape = 's32[1]{0}', space=sflag, size = 0x4, scoped, tag = 'scoped memory for tpu_custom_call.1']
    #allocation4 [shape = 's32[1]{0}', space=sflag, size = 0x4, scoped, tag = 'scoped memory for tpu_custom_call.1']
    #allocation5 [shape = 'u8[131072]{0}', space=vmem, size = 0x20000, scoped, tag = 'input window, operand 1, single buffered']
    #allocation6 [shape = 's32[1]{0}', space=sflag, size = 0x4, scoped, tag = 'scoped memory for tpu_custom_call.1']
    #allocation7 [shape = 'u8[65536]{0}', space=vmem, size = 0x10000, scoped, tag = 'input window, operand 3, single buffered']
    #allocation8 [shape = 'u8[4096]{0}', space=vmem, size = 0x1000, scoped, tag = 'output window, operand 0, single buffered']
    %10 = vsyncpa [#allocation3], 0
    %11 = vsyncpa [#allocation6], 0
    %12 = vsyncpa [#allocation4], 0
    // Predicated region
    $region2: #{tpu_custom_call.1} parent=1 // pred_check
      _
    $region3: #{tpu_custom_call.1} parent=1 // pred_check_branch
      %14 = sbr.rel (0) target = $region5
    $region4: #{tpu_custom_call.1} parent=1 // pred_region
      %s16 = ssub.s32 128, 128
      %17 = vsyncadd [#allocation3], %s16
      %s19 = sshll.u32 [#allocation2], 4
      %s20 = int_to_ptr.vmem [resolvable:$true] %s19
      %22 = dma.hbm_to_vmem [thread:$0]  %s0, 128, %s20, [#allocation3]
    $region5: #{tpu_custom_call.1} parent=1 // pred_fallthru
      _
    // Predicated region
    $region6: #{tpu_custom_call.1} parent=1 // pred_check
      _
    $region7: #{tpu_custom_call.1} parent=1 // pred_check_branch
      %24 = sbr.rel (0) target = $region9
    $region8: #{tpu_custom_call.1} parent=1 // pred_region
      %s26 = ssub.s32 4096, 4096
      %27 = vsyncadd [#allocation6], %s26
      %s28 = sshll.u32 [#allocation5], 4
      %s29 = int_to_ptr.vmem [resolvable:$true] %s28
      %34 = dma.hbm_to_vmem [thread:$0]  %s1, 4096, %s29, [#allocation6], 256, 256, 16
    $region9: #{tpu_custom_call.1} parent=1 // pred_fallthru
      _
    // Predicated region
    $region10: #{tpu_custom_call.1} parent=1 // pred_check
      _
    $region11: #{tpu_custom_call.1} parent=1 // pred_check_branch
      %36 = sbr.rel (0) target = $region13
    $region12: #{tpu_custom_call.1} parent=1 // pred_region
      _
    $region13: #{tpu_custom_call.1} parent=1 // pred_fallthru
      _
    // Predicated region
    $region14: #{tpu_custom_call.1} parent=1 // pred_check
      _
    $region15: #{tpu_custom_call.1} parent=1 // pred_check_branch
      %38 = sbr.rel (0) target = $region17
    $region16: #{tpu_custom_call.1} parent=1 // pred_region
      %s40 = ssub.s32 2048, 2048
      %41 = vsyncadd [#allocation6], %s40
      %s42 = sshll.u32 [#allocation7], 4
      %s43 = int_to_ptr.vmem [resolvable:$true] %s42
      %48 = dma.hbm_to_vmem [thread:$0]  %s3, 2048, %s43, [#allocation6], 128, 128, 8
    $region17: #{tpu_custom_call.1} parent=1 // pred_fallthru
      _
    // Predicated region
    $region18: #{tpu_custom_call.1} parent=1 // pred_check
      _
    $region19: #{tpu_custom_call.1} parent=1 // pred_check_branch
      %50 = sbr.rel (0) target = $region21
    $region20: #{tpu_custom_call.1} parent=1 // pred_region
      _
    $region21: #{tpu_custom_call.1} parent=1 // pred_fallthru
      _
    // Predicated region
    $region22: #{tpu_custom_call.1} parent=1 // pred_check
      _
    $region23: #{tpu_custom_call.1} parent=1 // pred_check_branch
      %52 = sbr.rel (0) target = $region25
    $region24: #{tpu_custom_call.1} parent=1 // pred_region
      %53 = dma.done [#allocation3], 128
    $region25: #{tpu_custom_call.1} parent=1 // pred_fallthru
      _
    // Predicated region
    $region26: #{tpu_custom_call.1} parent=1 // pred_check
      _
    $region27: #{tpu_custom_call.1} parent=1 // pred_check_branch
      %55 = sbr.rel (0) target = $region29
    $region28: #{tpu_custom_call.1} parent=1 // pred_region
      %56 = dma.done [#allocation6], 4096
    $region29: #{tpu_custom_call.1} parent=1 // pred_fallthru
      _
    // Predicated region
    $region30: #{tpu_custom_call.1} parent=1 // pred_check
      _
    $region31: #{tpu_custom_call.1} parent=1 // pred_check_branch
      %58 = sbr.rel (0) target = $region33
    $region32: #{tpu_custom_call.1} parent=1 // pred_region
      %59 = dma.done [#allocation6], 2048
    $region33: #{tpu_custom_call.1} parent=1 // pred_fallthru
      _
    %v60 = vld [vmem:[#allocation2] sm:$0xff]
    %v61 = vld [vmem:[#allocation5] sm:$0xff]
    %v62 = vld [vmem:[#allocation5 + $0x8] sm:$0xff]
    %v63 = vld [vmem:[#allocation5 + $0x10] sm:$0xff]
    %v64 = vld [vmem:[#allocation5 + $0x18] sm:$0xff]
    %v65 = vld [vmem:[#allocation5 + $0x20] sm:$0xff]
    %v66 = vld [vmem:[#allocation5 + $0x28] sm:$0xff]
    %v67 = vld [vmem:[#allocation5 + $0x30] sm:$0xff]
    %v68 = vld [vmem:[#allocation5 + $0x38] sm:$0xff]
    %v69 = vld [vmem:[#allocation5 + $0x40] sm:$0xff]
    %v70 = vld [vmem:[#allocation5 + $0x48] sm:$0xff]
    %v71 = vld [vmem:[#allocation5 + $0x50] sm:$0xff]
    %v72 = vld [vmem:[#allocation5 + $0x58] sm:$0xff]
    %v73 = vld [vmem:[#allocation5 + $0x60] sm:$0xff]
    %v74 = vld [vmem:[#allocation5 + $0x68] sm:$0xff]
    %v75 = vld [vmem:[#allocation5 + $0x70] sm:$0xff]
    %v76 = vld [vmem:[#allocation5 + $0x78] sm:$0xff]
    %v77 = vld [vmem:[#allocation5 + $0x80] sm:$0xff]
    %v78 = vld [vmem:[#allocation5 + $0x88] sm:$0xff]
    %v79 = vld [vmem:[#allocation5 + $0x90] sm:$0xff]
    %v80 = vld [vmem:[#allocation5 + $0x98] sm:$0xff]
    %v81 = vld [vmem:[#allocation5 + $0xa0] sm:$0xff]
    %v82 = vld [vmem:[#allocation5 + $0xa8] sm:$0xff]
    %v83 = vld [vmem:[#allocation5 + $0xb0] sm:$0xff]
    %v84 = vld [vmem:[#allocation5 + $0xb8] sm:$0xff]
    %v85 = vld [vmem:[#allocation5 + $0xc0] sm:$0xff]
    %v86 = vld [vmem:[#allocation5 + $0xc8] sm:$0xff]
    %v87 = vld [vmem:[#allocation5 + $0xd0] sm:$0xff]
    %v88 = vld [vmem:[#allocation5 + $0xd8] sm:$0xff]
    %v89 = vld [vmem:[#allocation5 + $0xe0] sm:$0xff]
    %v90 = vld [vmem:[#allocation5 + $0xe8] sm:$0xff]
    %v91 = vld [vmem:[#allocation5 + $0xf0] sm:$0xff]
    %v92 = vld [vmem:[#allocation5 + $0xf8] sm:$0xff]
    %v93 = vld [vmem:[%s2] sm:$0x3]
    %v95 = vlaneseq
    %v96 = vshrl.u32 %v95, 7
    %v97 = vsub.s32 0, %v96
    %v98 = vrot.slane %v93, %v97
    %v99 = vlaneseq
    %v100 = vshrl.u32 %v99, 7
    %v101 = vsub.s32 1, %v100
    %v102 = vrot.slane %v93, %v101
    %105 = vmatprep.subr.mxu0 %v62
    %106 = vmatpush1.msra.mxu0 %v61
    %107 = vmatprep.subr.mxu0 %v64
    %108 = vmatpush1.msra.mxu0 %v63
    %109 = vmatprep.subr.mxu0 %v66
    %110 = vmatpush1.msra.mxu0 %v65
    %111 = vmatprep.subr.mxu0 %v68
    %112 = vmatpush1.msra.mxu0 %v67
    %113 = vmatprep.subr.mxu0 %v70
    %114 = vmatpush1.msra.mxu0 %v69
    %115 = vmatprep.subr.mxu0 %v72
    %116 = vmatpush1.msra.mxu0 %v71
    %117 = vmatprep.subr.mxu0 %v74
    %118 = vmatpush1.msra.mxu0 %v73
    %119 = vmatprep.subr.mxu0 %v76
    %120 = vmatpush1.msra.mxu0 %v75
    %121 = vmatprep.subr.mxu0 %v78
    %122 = vmatpush1.msra.mxu0 %v77
    %123 = vmatprep.subr.mxu0 %v80
    %124 = vmatpush1.msra.mxu0 %v79
    %125 = vmatprep.subr.mxu0 %v82
    %126 = vmatpush1.msra.mxu0 %v81
    %127 = vmatprep.subr.mxu0 %v84
    %128 = vmatpush1.msra.mxu0 %v83
    %129 = vmatprep.subr.mxu0 %v86
    %130 = vmatpush1.msra.mxu0 %v85
    %131 = vmatprep.subr.mxu0 %v88
    %132 = vmatpush1.msra.mxu0 %v87
    %133 = vmatprep.subr.mxu0 %v90
    %134 = vmatpush1.msra.mxu0 %v89
    %135 = vmatprep.subr.mxu0 %v92
    %136 = vmatpush1.msra.mxu0 %v91
    %137 = vmatprep.subr.mxu0 0.0
    %138 = vmatpush1.msra.mxu0 0.0
    %139 = vmatprep.subr.mxu0 0.0
    %140 = vmatpush1.msra.mxu0 0.0
    %141 = vmatprep.subr.mxu0 0.0
    %142 = vmatpush1.msra.mxu0 0.0
    %143 = vmatprep.subr.mxu0 0.0
    %144 = vmatpush1.msra.mxu0 0.0
    %145 = vmatprep.subr.mxu0 0.0
    %146 = vmatpush1.msra.mxu0 0.0
    %147 = vmatprep.subr.mxu0 0.0
    %148 = vmatpush1.msra.mxu0 0.0
    %149 = vmatprep.subr.mxu0 0.0
    %150 = vmatpush1.msra.mxu0 0.0
    %151 = vmatprep.subr.mxu0 0.0
    %152 = vmatpush1.msra.mxu0 0.0
    %153 = vmatprep.subr.mxu0 0.0
    %154 = vmatpush1.msra.mxu0 0.0
    %155 = vmatprep.subr.mxu0 0.0
    %156 = vmatpush1.msra.mxu0 0.0
    %157 = vmatprep.subr.mxu0 0.0
    %158 = vmatpush1.msra.mxu0 0.0
    %159 = vmatprep.subr.mxu0 0.0
    %160 = vmatpush1.msra.mxu0 0.0
    %161 = vmatprep.subr.mxu0 0.0
    %162 = vmatpush1.msra.mxu0 0.0
    %163 = vmatprep.subr.mxu0 0.0
    %164 = vmatpush1.msra.mxu0 0.0
    %165 = vmatprep.subr.mxu0 0.0
    %166 = vmatpush1.msra.mxu0 0.0
    %167 = vmatprep.subr.mxu0 0.0
    %168 = vmatpush1.msra.mxu0 0.0
    %169 = vmatprep.mubr.f32.mxu0 0.0
    %170 = vmatmul.mubr.f32.gmra.mrb[0].mxu0 %v60
    %v171 = vpop.f32.mrb[0].mxu0
    %v172 = vadd.f32 %v98, %v171
    %v173 = vpop.f32.mrb[0].mxu0
    %v174 = vadd.f32 %v102, %v173
    %175 = vdwg.mxu0
    %v176 = vmul.f32 %v172, 0.5
    %v177 = vmul.f32 %v172, 0.70710677
    %v178 = verf.f32.pop %v177
    %v179 = vadd.f32 %v178, 1.0
    %v180 = vmul.f32 %v176, %v179
    %v181 = vld [vmem:[#allocation7] sm:$0xff]
    %v182 = vld [vmem:[#allocation7 + $0x8] sm:$0xff]
    %v183 = vld [vmem:[#allocation7 + $0x10] sm:$0xff]
    %v184 = vld [vmem:[#allocation7 + $0x18] sm:$0xff]
    %v185 = vld [vmem:[#allocation7 + $0x20] sm:$0xff]
    %v186 = vld [vmem:[#allocation7 + $0x28] sm:$0xff]
    %v187 = vld [vmem:[#allocation7 + $0x30] sm:$0xff]
    %v188 = vld [vmem:[#allocation7 + $0x38] sm:$0xff]
    %v189 = vld [vmem:[#allocation7 + $0x40] sm:$0xff]
    %v190 = vld [vmem:[#allocation7 + $0x48] sm:$0xff]
    %v191 = vld [vmem:[#allocation7 + $0x50] sm:$0xff]
    %v192 = vld [vmem:[#allocation7 + $0x58] sm:$0xff]
    %v193 = vld [vmem:[#allocation7 + $0x60] sm:$0xff]
    %v194 = vld [vmem:[#allocation7 + $0x68] sm:$0xff]
    %v195 = vld [vmem:[#allocation7 + $0x70] sm:$0xff]
    %v196 = vld [vmem:[#allocation7 + $0x78] sm:$0xff]
    %v197 = vld [vmem:[%s4] sm:$0x1]
    %v199 = vlaneseq
    %v200 = vshrl.u32 %v199, 7
    %v201 = vsub.s32 0, %v200
    %v202 = vrot.slane %v197, %v201
    %204 = vmatprep.subr.mxu0 0.0
    %205 = vmatpush1.msra.mxu0 %v181
    %206 = vmatprep.subr.mxu0 0.0
    %207 = vmatpush1.msra.mxu0 %v182
    %208 = vmatprep.subr.mxu0 0.0
    %209 = vmatpush1.msra.mxu0 %v183
    %210 = vmatprep.subr.mxu0 0.0
    %211 = vmatpush1.msra.mxu0 %v184
    %212 = vmatprep.subr.mxu0 0.0
    %213 = vmatpush1.msra.mxu0 %v185
    %214 = vmatprep.subr.mxu0 0.0
    %215 = vmatpush1.msra.mxu0 %v186
    %216 = vmatprep.subr.mxu0 0.0
    %217 = vmatpush1.msra.mxu0 %v187
    %218 = vmatprep.subr.mxu0 0.0
    %219 = vmatpush1.msra.mxu0 %v188
    %220 = vmatprep.subr.mxu0 0.0
    %221 = vmatpush1.msra.mxu0 %v189
    %222 = vmatprep.subr.mxu0 0.0
    %223 = vmatpush1.msra.mxu0 %v190
    %224 = vmatprep.subr.mxu0 0.0
    %225 = vmatpush1.msra.mxu0 %v191
    %226 = vmatprep.subr.mxu0 0.0
    %227 = vmatpush1.msra.mxu0 %v192
    %228 = vmatprep.subr.mxu0 0.0
    %229 = vmatpush1.msra.mxu0 %v193
    %230 = vmatprep.subr.mxu0 0.0
    %231 = vmatpush1.msra.mxu0 %v194
    %232 = vmatprep.subr.mxu0 0.0
    %233 = vmatpush1.msra.mxu0 %v195
    %234 = vmatprep.subr.mxu0 0.0
    %235 = vmatpush1.msra.mxu0 %v196
    %236 = vmatprep.subr.mxu0 0.0
    %237 = vmatpush1.msra.mxu0 0.0
    %238 = vmatprep.subr.mxu0 0.0
    %239 = vmatpush1.msra.mxu0 0.0
    %240 = vmatprep.subr.mxu0 0.0
    %241 = vmatpush1.msra.mxu0 0.0
    %242 = vmatprep.subr.mxu0 0.0
    %243 = vmatpush1.msra.mxu0 0.0
    %244 = vmatprep.subr.mxu0 0.0
    %245 = vmatpush1.msra.mxu0 0.0
    %246 = vmatprep.subr.mxu0 0.0
    %247 = vmatpush1.msra.mxu0 0.0
    %248 = vmatprep.subr.mxu0 0.0
    %249 = vmatpush1.msra.mxu0 0.0
    %250 = vmatprep.subr.mxu0 0.0
    %251 = vmatpush1.msra.mxu0 0.0
    %252 = vmatprep.subr.mxu0 0.0
    %253 = vmatpush1.msra.mxu0 0.0
    %254 = vmatprep.subr.mxu0 0.0
    %255 = vmatpush1.msra.mxu0 0.0
    %256 = vmatprep.subr.mxu0 0.0
    %257 = vmatpush1.msra.mxu0 0.0
    %258 = vmatprep.subr.mxu0 0.0
    %259 = vmatpush1.msra.mxu0 0.0
    %260 = vmatprep.subr.mxu0 0.0
    %261 = vmatpush1.msra.mxu0 0.0
    %262 = vmatprep.subr.mxu0 0.0
    %263 = vmatpush1.msra.mxu0 0.0
    %264 = vmatprep.subr.mxu0 0.0
    %265 = vmatpush1.msra.mxu0 0.0
    %266 = vmatprep.subr.mxu0 0.0
    %267 = vmatpush1.msra.mxu0 0.0
    %268 = vmatprep.mubr.f32.mxu0 0.0
    %269 = vmatmul.mubr.f32.gmra.mrb[0].mxu0 %v180
    %v270 = vpop.f32.mrb[0].mxu0
    %v271 = vadd.f32 %v202, %v270
    %v272 = vpop.f32.mrb[0].mxu0
    %273 = vdwg.mxu0
    %v274 = vmul.f32 %v271, 0.5
    %v275 = vmul.f32 %v271, 0.70710677
    %v276 = verf.f32.pop %v275
    %v277 = vadd.f32 %v276, 1.0
    %v278 = vmul.f32 %v274, %v277
    %v279 = vadd.f32 %v278, %v174
    %280 = vst [vmem:[#allocation8] sm:$0xff] %v279
    // Predicated region
    $region34: #{tpu_custom_call.1} parent=1 // pred_check
      _
    $region35: #{tpu_custom_call.1} parent=1 // pred_check_branch
      %282 = sbr.rel (0) target = $region37
    $region36: #{tpu_custom_call.1} parent=1 // pred_region
      %s284 = ssub.s32 128, 128
      %285 = vsyncadd [#allocation4], %s284
      %s287 = sshll.u32 [#allocation8], 4
      %s288 = int_to_ptr.vmem [resolvable:$true] %s287
      %290 = dma.vmem_to_hbm [thread:$0]  %s288, 128, %s5, [#allocation4]
    $region37: #{tpu_custom_call.1} parent=1 // pred_fallthru
      _
    // Predicated region
    $region38: #{tpu_custom_call.1} parent=1 // pred_check
      _
    $region39: #{tpu_custom_call.1} parent=1 // pred_check_branch
      %292 = sbr.rel (0) target = $region41
    $region40: #{tpu_custom_call.1} parent=1 // pred_region
      %293 = dma.done [#allocation4], 128
    $region41: #{tpu_custom_call.1} parent=1 // pred_fallthru
      _
    %294 = vsyncpa [#allocation3], 1
    %295 = vsyncpa [#allocation6], 1
    %296 = vsyncpa [#allocation4], 1

</llo_original>
